<compile_context>
chip_gen: v6e
topology: v6e:2x2x1
jax: 0.10.0
libtpu: 0.0.40
codegen_flags: <defaults>
</compile_context>

<pallas_src>
import math
import functools

import jax
import jax.numpy as jnp
from jax.experimental import pallas as pl
from jax.experimental.pallas import tpu as pltpu

_MIB = 1024 * 1024


def _pe_add_kernel(x_ref, pe_ref, o_ref):
    # x_ref, o_ref: (tile_s, B, D)  one seq-tile slab of x, native layout
    # pe_ref      : (tile_s, D)     matching rows of the positional table
    x = x_ref[...]
    pe = pe_ref[...][:, None, :]                      # (tile_s, 1, D) sublane bcast
    acc_dtype = jnp.promote_types(x.dtype, pe.dtype)  # add in the wider dtype
    o_ref[...] = (x.astype(acc_dtype) + pe.astype(acc_dtype)).astype(o_ref.dtype)


def make_positional_encoding(d_model: int, max_len: int = 5000,
                             dtype=jnp.float32) -> jnp.ndarray:
    """Deterministic pe table, identical to the PyTorch __init__.

    Returned shape is (max_len, d_model) == the module's pe[:, 0, :].
    Passing dtype=jnp.bfloat16 halves the pe HBM stream; the kernel upcasts
    in-VMEM (f32 default kept for exact numerical parity with the reference).
    """
    position = jnp.arange(max_len, dtype=jnp.float32)[:, None]              # (L, 1)
    div_term = jnp.exp(jnp.arange(0, d_model, 2, dtype=jnp.float32)
                       * (-math.log(10000.0) / d_model))                    # (ceil(D/2),)
    ang = position * div_term                                               # (L, ceil(D/2))
    pe = jnp.zeros((max_len, d_model), dtype=jnp.float32)
    pe = pe.at[:, 0::2].set(jnp.sin(ang))
    pe = pe.at[:, 1::2].set(jnp.cos(ang[:, : d_model // 2]))                # odd-D safe
    return pe.astype(dtype)


def _vmem_budget() -> tuple[int, int]:
    """(target_block_bytes, vmem_limit_bytes), sized per TPU generation."""
    try:
        cap = int(pltpu.get_tpu_info().vmem_capacity_bytes)
    except Exception:
        cap = 64 * _MIB                 # conservative (v7x-sized) fallback
    if cap >= 100 * _MIB:               # v5e / v6e: 128 MiB physical VMEM
        return 8 * _MIB, 80 * _MIB
    return 4 * _MIB, 48 * _MIB          # v7x: 64 MiB per TensorCore


def _choose_tile_s(seq_len: int, row_bytes: int, target_block_bytes: int) -> int:
    """Largest multiple-of-8 seq-tile whose (tile_s, B, D) block is about
    `target_block_bytes`, capped at the rounded-up sequence length.  The tile
    is only halved when the 1-D seq grid would otherwise be a single step
    (only v7x megacore needs >= 2 grid cells)."""
    tile = max(8, (target_block_bytes // max(row_bytes, 1)) // 8 * 8)
    s_cap = ((seq_len + 7) // 8) * 8
    tile = min(tile, s_cap)
    if seq_len > 8 and pl.cdiv(seq_len, tile) < 2:
        tile = max(8, (s_cap // 2) // 8 * 8)
    return tile


@functools.partial(jax.jit, donate_argnums=(0,))
def positional_encoding_forward(x: jnp.ndarray, pe: jnp.ndarray) -> jnp.ndarray:
    """Forward pass: x + pe[:seq_len] (dropout in eval mode = identity).

    x : (S, B, D)      activations — buffer is donated and overwritten in place
    pe: (max_len, D)   positional table from make_positional_encoding
    """
    S, B, D = x.shape
    max_len, Dp = pe.shape
    assert Dp == D, "pe table d_model mismatch"
    assert S <= max_len, "sequence longer than max_len"

    itemsize = jnp.dtype(x.dtype).itemsize
    target_block_bytes, vmem_limit = _vmem_budget()
    tile_s = _choose_tile_s(S, B * D * itemsize, target_block_bytes)
    n_s = pl.cdiv(S, tile_s)        # masked short last block handles ragged S

    # Worst-case resident VMEM: double-buffered x, out and pe blocks (+headroom).
    needed = 2 * (2 * tile_s * B * D * itemsize
                  + tile_s * D * jnp.dtype(pe.dtype).itemsize)
    vmem_limit = max(vmem_limit, needed + 4 * _MIB)

    out = pl.pallas_call(
        _pe_add_kernel,
        out_shape=jax.ShapeDtypeStruct((S, B, D), x.dtype),
        grid_spec=pltpu.PrefetchScalarGridSpec(
            num_scalar_prefetch=0,
            grid=(n_s,),
            in_specs=[
                pl.BlockSpec((tile_s, B, D), lambda i: (i, 0, 0)),   # x slab
                pl.BlockSpec((tile_s, D),    lambda i: (i, 0)),      # pe rows
            ],
            out_specs=pl.BlockSpec((tile_s, B, D), lambda i: (i, 0, 0)),
        ),
        # Pure elementwise overwrite of x: reuse its (donated) HBM buffer.
        input_output_aliases={0: 0},
        compiler_params=pltpu.CompilerParams(
            dimension_semantics=("parallel",),
            vmem_limit_bytes=vmem_limit,
        ),
    )(x, pe)

    # TODO(synk): nn.Dropout(p=0.1) in training mode is stochastic; eval-mode
    # semantics (identity) are used here.  A train-mode variant could use
    # pltpu.prng_seed + pltpu.stateful_bernoulli inside the kernel.
    return out


if __name__ == "__main__":
    key = jax.random.PRNGKey(0)

    seq_len, batch, d_model = 128, 2, 32        # small demo shapes
    max_len = 512

    x = jax.random.normal(key, (seq_len, batch, d_model), dtype=jnp.float32)
    pe = make_positional_encoding(d_model, max_len=max_len)

    # plain-JAX reference (eval-mode dropout); computed BEFORE the call since
    # x's buffer is donated to / overwritten by the kernel output.
    ref = x + pe[:seq_len][:, None, :]

    y = jax.block_until_ready(positional_encoding_forward(x, pe))

    assert y.shape == (seq_len, batch, d_model)
    assert jnp.allclose(y, ref, atol=1e-6, rtol=1e-6), "mismatch vs reference"

    print("KERNEL_OK")
</pallas_src>

<mosaic_0001>
module attributes {stable_mosaic.version = 11 : i64} {
  func.func @_pe_add_kernel(%arg0: i32, %arg1: memref<64x2x32xf32, #tpu.memory_space<vmem>>, %arg2: memref<64x32xf32, #tpu.memory_space<vmem>>, %arg3: memref<64x2x32xf32, #tpu.memory_space<vmem>>) attributes {dimension_semantics = [#tpu.dimension_semantics<parallel>], iteration_bounds = array<i64: 2>, scalar_prefetch = 0 : i64, scratch_operands = 0 : i64, tpu.core_type = #tpu.core_type<tc>, window_params = [{transform_indices = @transform_0, window_bounds = array<i64: 64, 2, 32>}, {transform_indices = @transform_1, window_bounds = array<i64: 64, 32>}, {transform_indices = @transform_2, window_bounds = array<i64: 64, 2, 32>}]} {
    %c0 = arith.constant 0 : index
    %c0_0 = arith.constant 0 : index
    %c0_1 = arith.constant 0 : index
    %0 = vector.load %arg1[%c0, %c0_0, %c0_1] : memref<64x2x32xf32, #tpu.memory_space<vmem>>, vector<64x2x32xf32>
    %c0_2 = arith.constant 0 : index
    %c0_3 = arith.constant 0 : index
    %1 = vector.load %arg2[%c0_2, %c0_3] : memref<64x32xf32, #tpu.memory_space<vmem>>, vector<64x32xf32>
    %2 = vector.shape_cast %1 : vector<64x32xf32> to vector<64x1x32xf32>
    %3 = vector.broadcast %2 : vector<64x1x32xf32> to vector<64x2x32xf32>
    %4 = arith.addf %0, %3 : vector<64x2x32xf32>
    %c0_4 = arith.constant 0 : index
    %c0_5 = arith.constant 0 : index
    %c0_6 = arith.constant 0 : index
    %5 = vector.load %arg3[%c0_4, %c0_5, %c0_6] : memref<64x2x32xf32, #tpu.memory_space<vmem>>, vector<64x2x32xf32>
    tpu.vector_store %arg3[%c0_4, %c0_5, %c0_6], %4 {strides = array<i32>} : memref<64x2x32xf32, #tpu.memory_space<vmem>>, vector<64x2x32xf32>,
    return
  }
  func.func @transform_0(%arg0: i32) -> (i32, i32, i32) {
    %c0_i32 = arith.constant 0 : i32
    %c0_i32_0 = arith.constant 0 : i32
    %c0_i32_1 = arith.constant 0 : i32
    return %arg0, %c0_i32, %c0_i32_0 : i32, i32, i32
  }
  func.func @transform_1(%arg0: i32) -> (i32, i32) {
    %c0_i32 = arith.constant 0 : i32
    %c0_i32_0 = arith.constant 0 : i32
    return %arg0, %c0_i32 : i32, i32
  }
  func.func @transform_2(%arg0: i32) -> (i32, i32, i32) {
    %c0_i32 = arith.constant 0 : i32
    %c0_i32_0 = arith.constant 0 : i32
    %c0_i32_1 = arith.constant 0 : i32
    return %arg0, %c0_i32, %c0_i32_0 : i32, i32, i32
  }
}

</mosaic_0001>

<llo_original>
// kernel: positional_encoding_forward.1
$region0: #{positional_encoding_forward.1}
  #allocation0 [shape = 'u32[]', space=smem, size = 0x4, offset = 0x4, fixed_abs, tag = 'smem constant byte address 0x4 - core index']
  #allocation1 [shape = 'u32[144,128]{1,0:T(1,128)}', space=vmem, size = 0x12000, scoped, tag = 'internal scratch']
  %s0 = inlined_call_operand.vmem [shape: f32[128,2,32], index: 0, kind: input, shape index: {}, may-alias: {0,2}]
  %s1 = inlined_call_operand.vmem [shape: f32[512,32], index: 1, kind: input, shape index: {}]
  %s2 = inlined_call_operand.vmem [shape: f32[128,2,32], index: 2, kind: output, shape index: {}, may-alias: {0,2}]
  %s3 = sld [smem:[#allocation0]]
  $region41: #{positional_encoding_forward.1} parent=0
    _
  %s5 = ssub.s32 1, %s3
  %s6 = scalar_select 0, %s5, %s3
  loop: start=0, step=1, limit=4
  $region2: #{positional_encoding_forward.1} parent=0 // loop_pre_header
    _
  $region3: #{positional_encoding_forward.1} parent=0 // loop_header
    %s8 = sphi 0, %s12
    %p9 = scmp.ge.s32.totalorder %s8, 4
    %s18 = sphi 0, %s20
    %s21 = sphi 0, %s18
    %s22 = sphi 0, %s21
    %s38 = sphi 0, %s22
    %s44 = sphi 0, %s46
    %s47 = sphi 0, %s44
    %s48 = sphi 0, %s47
    %s64 = sphi 0, %s48
    %s70 = sphi 0, %s72
    %s73 = sphi 0, %s70
    %s74 = sphi 0, %s73
    %s90 = sphi 0, %s74
  $region4: #{positional_encoding_forward.1} parent=0 // loop_header_branch
    %11 = sbr.rel (%p9) target = $region8
  $region5: #{positional_encoding_forward.1} parent=0 // loop_body
    %s13 = ssub.s32 %s8, 1
    %s14 = ssub.s32 %s8, 2
    %s15 = sadd.s32 %s8, 1
    %s16 = ssub.s32 %s8, %s15
    %p17 = scmp.eq.s32.totalorder %s16, 0
    %s19 = sadd.s32 %s18, 1
    %s20 = scalar_select %p17, %s18, %s19
    %p23 = pneg %p17
    %p24 = scmp.eq.s32.totalorder %s8, 1
    %p25 = por %p23, %p24
    %p26 = scmp.ne.s32.totalorder %s18, %s21
    %p27 = scmp.eq.s32.totalorder %s8, 0
    %p28 = por %p26, %p27
    %p29 = scmp.ne.s32.totalorder %s18, %s21
    %p30 = scmp.eq.s32.totalorder %s13, 1
    %p31 = por %p29, %p30
    %p32 = scmp.ne.s32.totalorder %s21, %s22
    %p33 = scmp.eq.s32.totalorder %s13, 0
    %p34 = por %p32, %p33
    %p35 = scmp.ne.s32.totalorder %s21, %s22
    %p36 = scmp.eq.s32.totalorder %s14, 1
    %p37 = por %p35, %p36
    %p39 = scmp.ne.s32.totalorder %s22, %s38
    %p40 = scmp.eq.s32.totalorder %s14, 0
    %p41 = por %p39, %p40
    %s42 = ssub.s32 %s8, %s15
    %p43 = scmp.eq.s32.totalorder %s42, 0
    %s45 = sadd.s32 %s44, 1
    %s46 = scalar_select %p43, %s44, %s45
    %p49 = pneg %p43
    %p50 = scmp.eq.s32.totalorder %s8, 1
    %p51 = por %p49, %p50
    %p52 = scmp.ne.s32.totalorder %s44, %s47
    %p53 = scmp.eq.s32.totalorder %s8, 0
    %p54 = por %p52, %p53
    %p55 = scmp.ne.s32.totalorder %s44, %s47
    %p56 = scmp.eq.s32.totalorder %s13, 1
    %p57 = por %p55, %p56
    %p58 = scmp.ne.s32.totalorder %s47, %s48
    %p59 = scmp.eq.s32.totalorder %s13, 0
    %p60 = por %p58, %p59
    %p61 = scmp.ne.s32.totalorder %s47, %s48
    %p62 = scmp.eq.s32.totalorder %s14, 1
    %p63 = por %p61, %p62
    %p65 = scmp.ne.s32.totalorder %s48, %s64
    %p66 = scmp.eq.s32.totalorder %s14, 0
    %p67 = por %p65, %p66
    %s68 = ssub.s32 %s8, %s15
    %p69 = scmp.eq.s32.totalorder %s68, 0
    %s71 = sadd.s32 %s70, 1
    %s72 = scalar_select %p69, %s70, %s71
    %p75 = pneg %p69
    %p76 = scmp.eq.s32.totalorder %s8, 1
    %p77 = por %p75, %p76
    %p78 = scmp.ne.s32.totalorder %s70, %s73
    %p79 = scmp.eq.s32.totalorder %s8, 0
    %p80 = por %p78, %p79
    %p81 = scmp.ne.s32.totalorder %s70, %s73
    %p82 = scmp.eq.s32.totalorder %s13, 1
    %p83 = por %p81, %p82
    %p84 = scmp.ne.s32.totalorder %s73, %s74
    %p85 = scmp.eq.s32.totalorder %s13, 0
    %p86 = por %p84, %p85
    %p87 = scmp.ne.s32.totalorder %s73, %s74
    %p88 = scmp.eq.s32.totalorder %s14, 1
    %p89 = por %p87, %p88
    %p91 = scmp.ne.s32.totalorder %s74, %s90
    %p92 = scmp.eq.s32.totalorder %s14, 0
    %p93 = por %p91, %p92
    %p94 = scmp.le.s32.totalorder 1, %s8
    %p95 = scmp.lt.s32.totalorder %s8, 3
    %p96 = pnand %p94, %p95
    %p97 = pneg %p96
    // Predicated region
    $region9: #{positional_encoding_forward.1} parent=5 // pred_check
      _
    $region10: #{positional_encoding_forward.1} parent=5 // pred_check_branch
      %99 = sbr.rel (%p96) target = $region12
    $region11: #{positional_encoding_forward.1} parent=5 // pred_region
      %s100 = ssub.s32 %s8, 1
    $region12: #{positional_encoding_forward.1} parent=5 // pred_fallthru
      _
    %p101 = scmp.lt.s32.totalorder %s8, 2
    // Predicated region
    $region13: #{positional_encoding_forward.1} parent=5 // pred_check
      %p102 = pneg %p101
    $region14: #{positional_encoding_forward.1} parent=5 // pred_check_branch
      %104 = sbr.rel (%p102) target = $region16
    $region15: #{positional_encoding_forward.1} parent=5 // pred_region
      // Predicated region
      $region17: #{positional_encoding_forward.1} parent=15 // pred_check
        %p105 = pneg %p28
      $region18: #{positional_encoding_forward.1} parent=15 // pred_check_branch
        %107 = sbr.rel (%p105) target = $region20
      $region19: #{positional_encoding_forward.1} parent=15 // pred_region
        %s108 = smul.u32 64, %s8
        %p109 = scmp.lt.s32.totalorder %s108, 127
        %s110 = scalar_select %p109, %s108, 127
        %s111 = smul.addr %s110, 2
        %s112 = scalar_lea.vmem %s0, %s111
        %s113 = smul.u32 64, %s8
      $region20: #{positional_encoding_forward.1} parent=15 // pred_fallthru
        _
      // Predicated region
      $region21: #{positional_encoding_forward.1} parent=15 // pred_check
        %p114 = pneg %p54
      $region22: #{positional_encoding_forward.1} parent=15 // pred_check_branch
        %116 = sbr.rel (%p114) target = $region24
      $region23: #{positional_encoding_forward.1} parent=15 // pred_region
        %s117 = smul.u32 8, %s8
        %p118 = scmp.lt.s32.totalorder %s117, 63
        %s119 = scalar_select %p118, %s117, 63
        %s120 = smul.addr %s119, 8
        %s121 = scalar_lea.vmem %s1, %s120
        %s122 = smul.u32 8, %s8
      $region24: #{positional_encoding_forward.1} parent=15 // pred_fallthru
        _
    $region16: #{positional_encoding_forward.1} parent=5 // pred_fallthru
      _
    %p123 = scmp.le.s32.totalorder 1, %s8
    %p124 = scmp.lt.s32.totalorder %s8, 3
    %p125 = pnand %p123, %p124
    %p126 = pneg %p125
    // Predicated region
    $region25: #{positional_encoding_forward.1} parent=5 // pred_check
      _
    $region26: #{positional_encoding_forward.1} parent=5 // pred_check_branch
      %128 = sbr.rel (%p125) target = $region28
    $region27: #{positional_encoding_forward.1} parent=5 // pred_region
      %s129 = ssub.s32 %s8, 1
      %s130 = smul.u32 64, %s13
      %p131 = scmp.lt.s32.totalorder %s130, 127
      %s132 = scalar_select %p131, %s130, 127
      %s133 = smul.addr %s132, 2
      %s134 = scalar_lea.vmem %s0, %s133
      %p135 = pneg %p34
      %p136 = pneg %p31
      %s137 = smul.u32 8, %s13
      %p138 = scmp.lt.s32.totalorder %s137, 63
      %s139 = scalar_select %p138, %s137, 63
      %s140 = smul.addr %s139, 8
      %s141 = scalar_lea.vmem %s1, %s140
      %p142 = pneg %p60
      %p143 = pneg %p57
      %p144 = pneg %p86
      %p145 = pneg %p83
      %s146 = smul.u32 64, %s13
      %p147 = scmp.lt.s32.totalorder %s146, 127
      %s148 = scalar_select %p147, %s146, 127
      %s149 = smul.addr %s148, 2
      %s150 = scalar_lea.vmem %s2, %s149
      %s151 = smul.u32 64, %s13
      %p152 = scmp.lt.s32.totalorder %s151, 127
      %s153 = scalar_select %p152, %s151, 127
      %s154 = smul.addr %s153, 2
      %s155 = scalar_lea.vmem %s0, %s154
      %s156 = smul.u32 64, %s13
      %s157 = smul.u32 8, %s13
      %p158 = scmp.lt.s32.totalorder %s157, 63
      %s159 = scalar_select %p158, %s157, 63
      %s160 = smul.addr %s159, 8
      %s161 = scalar_lea.vmem %s1, %s160
      %s162 = smul.u32 8, %s13
      %s163 = smul.u32 64, %s13
      %p164 = scmp.lt.s32.totalorder %s163, 127
      %s165 = scalar_select %p164, %s163, 127
      %s166 = smul.addr %s165, 2
      %s167 = scalar_lea.vmem %s2, %s166
      %s168 = smul.u32 64, %s13
      %v169 = vld [vmem:[%s155] sm:$0x3]
      %v170 = vld [vmem:[%s155 + $0x2] sm:$0x3]
      %v171 = vld [vmem:[%s155 + $0x4] sm:$0x3]
      %v172 = vld [vmem:[%s155 + $0x6] sm:$0x3]
      %v173 = vld [vmem:[%s155 + $0x8] sm:$0x3]
      %v174 = vld [vmem:[%s155 + $0xa] sm:$0x3]
      %v175 = vld [vmem:[%s155 + $0xc] sm:$0x3]
      %v176 = vld [vmem:[%s155 + $0xe] sm:$0x3]
      %v177 = vld [vmem:[%s155 + $0x10] sm:$0x3]
      %v178 = vld [vmem:[%s155 + $0x12] sm:$0x3]
      %v179 = vld [vmem:[%s155 + $0x14] sm:$0x3]
      %v180 = vld [vmem:[%s155 + $0x16] sm:$0x3]
      %v181 = vld [vmem:[%s155 + $0x18] sm:$0x3]
      %v182 = vld [vmem:[%s155 + $0x1a] sm:$0x3]
      %v183 = vld [vmem:[%s155 + $0x1c] sm:$0x3]
      %v184 = vld [vmem:[%s155 + $0x1e] sm:$0x3]
      %v185 = vld [vmem:[%s155 + $0x20] sm:$0x3]
      %v186 = vld [vmem:[%s155 + $0x22] sm:$0x3]
      %v187 = vld [vmem:[%s155 + $0x24] sm:$0x3]
      %v188 = vld [vmem:[%s155 + $0x26] sm:$0x3]
      %v189 = vld [vmem:[%s155 + $0x28] sm:$0x3]
      %v190 = vld [vmem:[%s155 + $0x2a] sm:$0x3]
      %v191 = vld [vmem:[%s155 + $0x2c] sm:$0x3]
      %v192 = vld [vmem:[%s155 + $0x2e] sm:$0x3]
      %v193 = vld [vmem:[%s155 + $0x30] sm:$0x3]
      %v194 = vld [vmem:[%s155 + $0x32] sm:$0x3]
      %v195 = vld [vmem:[%s155 + $0x34] sm:$0x3]
      %v196 = vld [vmem:[%s155 + $0x36] sm:$0x3]
      %v197 = vld [vmem:[%s155 + $0x38] sm:$0x3]
      %v198 = vld [vmem:[%s155 + $0x3a] sm:$0x3]
      %v199 = vld [vmem:[%s155 + $0x3c] sm:$0x3]
      %v200 = vld [vmem:[%s155 + $0x3e] sm:$0x3]
      %v201 = vld [vmem:[%s155 + $0x40] sm:$0x3]
      %v202 = vld [vmem:[%s155 + $0x42] sm:$0x3]
      %v203 = vld [vmem:[%s155 + $0x44] sm:$0x3]
      %v204 = vld [vmem:[%s155 + $0x46] sm:$0x3]
      %v205 = vld [vmem:[%s155 + $0x48] sm:$0x3]
      %v206 = vld [vmem:[%s155 + $0x4a] sm:$0x3]
      %v207 = vld [vmem:[%s155 + $0x4c] sm:$0x3]
      %v208 = vld [vmem:[%s155 + $0x4e] sm:$0x3]
      %v209 = vld [vmem:[%s155 + $0x50] sm:$0x3]
      %v210 = vld [vmem:[%s155 + $0x52] sm:$0x3]
      %v211 = vld [vmem:[%s155 + $0x54] sm:$0x3]
      %v212 = vld [vmem:[%s155 + $0x56] sm:$0x3]
      %v213 = vld [vmem:[%s155 + $0x58] sm:$0x3]
      %v214 = vld [vmem:[%s155 + $0x5a] sm:$0x3]
      %v215 = vld [vmem:[%s155 + $0x5c] sm:$0x3]
      %v216 = vld [vmem:[%s155 + $0x5e] sm:$0x3]
      %v217 = vld [vmem:[%s155 + $0x60] sm:$0x3]
      %v218 = vld [vmem:[%s155 + $0x62] sm:$0x3]
      %v219 = vld [vmem:[%s155 + $0x64] sm:$0x3]
      %v220 = vld [vmem:[%s155 + $0x66] sm:$0x3]
      %v221 = vld [vmem:[%s155 + $0x68] sm:$0x3]
      %v222 = vld [vmem:[%s155 + $0x6a] sm:$0x3]
      %v223 = vld [vmem:[%s155 + $0x6c] sm:$0x3]
      %v224 = vld [vmem:[%s155 + $0x6e] sm:$0x3]
      %v225 = vld [vmem:[%s155 + $0x70] sm:$0x3]
      %v226 = vld [vmem:[%s155 + $0x72] sm:$0x3]
      %v227 = vld [vmem:[%s155 + $0x74] sm:$0x3]
      %v228 = vld [vmem:[%s155 + $0x76] sm:$0x3]
      %v229 = vld [vmem:[%s155 + $0x78] sm:$0x3]
      %v230 = vld [vmem:[%s155 + $0x7a] sm:$0x3]
      %v231 = vld [vmem:[%s155 + $0x7c] sm:$0x3]
      %v232 = vld [vmem:[%s155 + $0x7e] sm:$0x3]
      %v233 = vld [vmem:[%s161] sm:$0xff]
      %v234 = vld [vmem:[%s161 + $0x8] sm:$0xff]
      %v235 = vld [vmem:[%s161 + $0x10] sm:$0xff]
      %v236 = vld [vmem:[%s161 + $0x18] sm:$0xff]
      %v237 = vld [vmem:[%s161 + $0x20] sm:$0xff]
      %v238 = vld [vmem:[%s161 + $0x28] sm:$0xff]
      %v239 = vld [vmem:[%s161 + $0x30] sm:$0xff]
      %v240 = vld [vmem:[%s161 + $0x38] sm:$0xff]
      %v249 = vcombine.high %v233, %v233
      %v251 = vunpack.c.l.s4 1966171168
      %v252 = vunpack.c.0.s8 %v251
      %v253 = vlaneseq
      %v254 = vshrl.u32 %v253, 7
      %v255 = vsub.s32 %v252, %v254
      %v256 = vrot.slane %v233, %v255
      %v258 = vunpack.c.l.s4 1966171168
      %v259 = vunpack.c.0.s8 %v258
      %v260 = vlaneseq
      %v261 = vshrl.u32 %v260, 7
      %v262 = vsub.s32 %v259, %v261
      %v263 = vrot.slane %v249, %v262
      %v264 = vcombine.high %v256, %v256
      %v265 = vcombine.high %v263, %v263
      %v267 = vunpack.c.l.s4 1966171168
      %v268 = vunpack.c.0.s8 %v267
      %v269 = vlaneseq
      %v270 = vshrl.u32 %v269, 7
      %v271 = vsub.s32 %v268, %v270
      %v272 = vrot.slane %v256, %v271
      %v274 = vunpack.c.l.s4 1966171168
      %v275 = vunpack.c.0.s8 %v274
      %v276 = vlaneseq
      %v277 = vshrl.u32 %v276, 7
      %v278 = vsub.s32 %v275, %v277
      %v279 = vrot.slane %v263, %v278
      %v281 = vunpack.c.l.s4 1966171168
      %v282 = vunpack.c.0.s8 %v281
      %v283 = vlaneseq
      %v284 = vshrl.u32 %v283, 7
      %v285 = vsub.s32 %v282, %v284
      %v286 = vrot.slane %v264, %v285
      %v288 = vunpack.c.l.s4 1966171168
      %v289 = vunpack.c.0.s8 %v288
      %v290 = vlaneseq
      %v291 = vshrl.u32 %v290, 7
      %v292 = vsub.s32 %v289, %v291
      %v293 = vrot.slane %v265, %v292
      %v294 = vcombine.high %v272, %v272
      %v295 = vcombine.high %v279, %v279
      %v296 = vcombine.high %v286, %v286
      %v297 = vcombine.high %v293, %v293
      %v298 = vcombine.high %v234, %v234
      %v300 = vunpack.c.l.s4 1966171168
      %v301 = vunpack.c.0.s8 %v300
      %v302 = vlaneseq
      %v303 = vshrl.u32 %v302, 7
      %v304 = vsub.s32 %v301, %v303
      %v305 = vrot.slane %v234, %v304
      %v307 = vunpack.c.l.s4 1966171168
      %v308 = vunpack.c.0.s8 %v307
      %v309 = vlaneseq
      %v310 = vshrl.u32 %v309, 7
      %v311 = vsub.s32 %v308, %v310
      %v312 = vrot.slane %v298, %v311
      %v313 = vcombine.high %v305, %v305
      %v314 = vcombine.high %v312, %v312
      %v316 = vunpack.c.l.s4 1966171168
      %v317 = vunpack.c.0.s8 %v316
      %v318 = vlaneseq
      %v319 = vshrl.u32 %v318, 7
      %v320 = vsub.s32 %v317, %v319
      %v321 = vrot.slane %v305, %v320
      %v323 = vunpack.c.l.s4 1966171168
      %v324 = vunpack.c.0.s8 %v323
      %v325 = vlaneseq
      %v326 = vshrl.u32 %v325, 7
      %v327 = vsub.s32 %v324, %v326
      %v328 = vrot.slane %v312, %v327
      %v330 = vunpack.c.l.s4 1966171168
      %v331 = vunpack.c.0.s8 %v330
      %v332 = vlaneseq
      %v333 = vshrl.u32 %v332, 7
      %v334 = vsub.s32 %v331, %v333
      %v335 = vrot.slane %v313, %v334
      %v337 = vunpack.c.l.s4 1966171168
      %v338 = vunpack.c.0.s8 %v337
      %v339 = vlaneseq
      %v340 = vshrl.u32 %v339, 7
      %v341 = vsub.s32 %v338, %v340
      %v342 = vrot.slane %v314, %v341
      %v343 = vcombine.high %v321, %v321
      %v344 = vcombine.high %v328, %v328
      %v345 = vcombine.high %v335, %v335
      %v346 = vcombine.high %v342, %v342
      %v347 = vcombine.high %v235, %v235
      %v349 = vunpack.c.l.s4 1966171168
      %v350 = vunpack.c.0.s8 %v349
      %v351 = vlaneseq
      %v352 = vshrl.u32 %v351, 7
      %v353 = vsub.s32 %v350, %v352
      %v354 = vrot.slane %v235, %v353
      %v356 = vunpack.c.l.s4 1966171168
      %v357 = vunpack.c.0.s8 %v356
      %v358 = vlaneseq
      %v359 = vshrl.u32 %v358, 7
      %v360 = vsub.s32 %v357, %v359
      %v361 = vrot.slane %v347, %v360
      %v362 = vcombine.high %v354, %v354
      %v363 = vcombine.high %v361, %v361
      %v365 = vunpack.c.l.s4 1966171168
      %v366 = vunpack.c.0.s8 %v365
      %v367 = vlaneseq
      %v368 = vshrl.u32 %v367, 7
      %v369 = vsub.s32 %v366, %v368
      %v370 = vrot.slane %v354, %v369
      %v372 = vunpack.c.l.s4 1966171168
      %v373 = vunpack.c.0.s8 %v372
      %v374 = vlaneseq
      %v375 = vshrl.u32 %v374, 7
      %v376 = vsub.s32 %v373, %v375
      %v377 = vrot.slane %v361, %v376
      %v379 = vunpack.c.l.s4 1966171168
      %v380 = vunpack.c.0.s8 %v379
      %v381 = vlaneseq
      %v382 = vshrl.u32 %v381, 7
      %v383 = vsub.s32 %v380, %v382
      %v384 = vrot.slane %v362, %v383
      %v386 = vunpack.c.l.s4 1966171168
      %v387 = vunpack.c.0.s8 %v386
      %v388 = vlaneseq
      %v389 = vshrl.u32 %v388, 7
      %v390 = vsub.s32 %v387, %v389
      %v391 = vrot.slane %v363, %v390
      %v392 = vcombine.high %v370, %v370
      %v393 = vcombine.high %v377, %v377
      %v394 = vcombine.high %v384, %v384
      %v395 = vcombine.high %v391, %v391
      %v396 = vcombine.high %v236, %v236
      %v398 = vunpack.c.l.s4 1966171168
      %v399 = vunpack.c.0.s8 %v398
      %v400 = vlaneseq
      %v401 = vshrl.u32 %v400, 7
      %v402 = vsub.s32 %v399, %v401
      %v403 = vrot.slane %v236, %v402
      %v405 = vunpack.c.l.s4 1966171168
      %v406 = vunpack.c.0.s8 %v405
      %v407 = vlaneseq
      %v408 = vshrl.u32 %v407, 7
      %v409 = vsub.s32 %v406, %v408
      %v410 = vrot.slane %v396, %v409
      %v411 = vcombine.high %v403, %v403
      %v412 = vcombine.high %v410, %v410
      %v414 = vunpack.c.l.s4 1966171168
      %v415 = vunpack.c.0.s8 %v414
      %v416 = vlaneseq
      %v417 = vshrl.u32 %v416, 7
      %v418 = vsub.s32 %v415, %v417
      %v419 = vrot.slane %v403, %v418
      %v421 = vunpack.c.l.s4 1966171168
      %v422 = vunpack.c.0.s8 %v421
      %v423 = vlaneseq
      %v424 = vshrl.u32 %v423, 7
      %v425 = vsub.s32 %v422, %v424
      %v426 = vrot.slane %v410, %v425
      %v428 = vunpack.c.l.s4 1966171168
      %v429 = vunpack.c.0.s8 %v428
      %v430 = vlaneseq
      %v431 = vshrl.u32 %v430, 7
      %v432 = vsub.s32 %v429, %v431
      %v433 = vrot.slane %v411, %v432
      %v435 = vunpack.c.l.s4 1966171168
      %v436 = vunpack.c.0.s8 %v435
      %v437 = vlaneseq
      %v438 = vshrl.u32 %v437, 7
      %v439 = vsub.s32 %v436, %v438
      %v440 = vrot.slane %v412, %v439
      %v441 = vcombine.high %v419, %v419
      %v442 = vcombine.high %v426, %v426
      %v443 = vcombine.high %v433, %v433
      %v444 = vcombine.high %v440, %v440
      %v445 = vcombine.high %v237, %v237
      %v447 = vunpack.c.l.s4 1966171168
      %v448 = vunpack.c.0.s8 %v447
      %v449 = vlaneseq
      %v450 = vshrl.u32 %v449, 7
      %v451 = vsub.s32 %v448, %v450
      %v452 = vrot.slane %v237, %v451
      %v454 = vunpack.c.l.s4 1966171168
      %v455 = vunpack.c.0.s8 %v454
      %v456 = vlaneseq
      %v457 = vshrl.u32 %v456, 7
      %v458 = vsub.s32 %v455, %v457
      %v459 = vrot.slane %v445, %v458
      %v460 = vcombine.high %v452, %v452
      %v461 = vcombine.high %v459, %v459
      %v463 = vunpack.c.l.s4 1966171168
      %v464 = vunpack.c.0.s8 %v463
      %v465 = vlaneseq
      %v466 = vshrl.u32 %v465, 7
      %v467 = vsub.s32 %v464, %v466
      %v468 = vrot.slane %v452, %v467
      %v470 = vunpack.c.l.s4 1966171168
      %v471 = vunpack.c.0.s8 %v470
      %v472 = vlaneseq
      %v473 = vshrl.u32 %v472, 7
      %v474 = vsub.s32 %v471, %v473
      %v475 = vrot.slane %v459, %v474
      %v477 = vunpack.c.l.s4 1966171168
      %v478 = vunpack.c.0.s8 %v477
      %v479 = vlaneseq
      %v480 = vshrl.u32 %v479, 7
      %v481 = vsub.s32 %v478, %v480
      %v482 = vrot.slane %v460, %v481
      %v484 = vunpack.c.l.s4 1966171168
      %v485 = vunpack.c.0.s8 %v484
      %v486 = vlaneseq
      %v487 = vshrl.u32 %v486, 7
      %v488 = vsub.s32 %v485, %v487
      %v489 = vrot.slane %v461, %v488
      %v490 = vcombine.high %v468, %v468
      %v491 = vcombine.high %v475, %v475
      %v492 = vcombine.high %v482, %v482
      %v493 = vcombine.high %v489, %v489
      %v494 = vcombine.high %v238, %v238
      %v496 = vunpack.c.l.s4 1966171168
      %v497 = vunpack.c.0.s8 %v496
      %v498 = vlaneseq
      %v499 = vshrl.u32 %v498, 7
      %v500 = vsub.s32 %v497, %v499
      %v501 = vrot.slane %v238, %v500
      %v503 = vunpack.c.l.s4 1966171168
      %v504 = vunpack.c.0.s8 %v503
      %v505 = vlaneseq
      %v506 = vshrl.u32 %v505, 7
      %v507 = vsub.s32 %v504, %v506
      %v508 = vrot.slane %v494, %v507
      %v509 = vcombine.high %v501, %v501
      %v510 = vcombine.high %v508, %v508
      %v512 = vunpack.c.l.s4 1966171168
      %v513 = vunpack.c.0.s8 %v512
      %v514 = vlaneseq
      %v515 = vshrl.u32 %v514, 7
      %v516 = vsub.s32 %v513, %v515
      %v517 = vrot.slane %v501, %v516
      %v519 = vunpack.c.l.s4 1966171168
      %v520 = vunpack.c.0.s8 %v519
      %v521 = vlaneseq
      %v522 = vshrl.u32 %v521, 7
      %v523 = vsub.s32 %v520, %v522
      %v524 = vrot.slane %v508, %v523
      %v526 = vunpack.c.l.s4 1966171168
      %v527 = vunpack.c.0.s8 %v526
      %v528 = vlaneseq
      %v529 = vshrl.u32 %v528, 7
      %v530 = vsub.s32 %v527, %v529
      %v531 = vrot.slane %v509, %v530
      %v533 = vunpack.c.l.s4 1966171168
      %v534 = vunpack.c.0.s8 %v533
      %v535 = vlaneseq
      %v536 = vshrl.u32 %v535, 7
      %v537 = vsub.s32 %v534, %v536
      %v538 = vrot.slane %v510, %v537
      %v539 = vcombine.high %v517, %v517
      %v540 = vcombine.high %v524, %v524
      %v541 = vcombine.high %v531, %v531
      %v542 = vcombine.high %v538, %v538
      %v543 = vcombine.high %v239, %v239
      %v545 = vunpack.c.l.s4 1966171168
      %v546 = vunpack.c.0.s8 %v545
      %v547 = vlaneseq
      %v548 = vshrl.u32 %v547, 7
      %v549 = vsub.s32 %v546, %v548
      %v550 = vrot.slane %v239, %v549
      %v552 = vunpack.c.l.s4 1966171168
      %v553 = vunpack.c.0.s8 %v552
      %v554 = vlaneseq
      %v555 = vshrl.u32 %v554, 7
      %v556 = vsub.s32 %v553, %v555
      %v557 = vrot.slane %v543, %v556
      %v558 = vcombine.high %v550, %v550
      %v559 = vcombine.high %v557, %v557
      %v561 = vunpack.c.l.s4 1966171168
      %v562 = vunpack.c.0.s8 %v561
      %v563 = vlaneseq
      %v564 = vshrl.u32 %v563, 7
      %v565 = vsub.s32 %v562, %v564
      %v566 = vrot.slane %v550, %v565
      %v568 = vunpack.c.l.s4 1966171168
      %v569 = vunpack.c.0.s8 %v568
      %v570 = vlaneseq
      %v571 = vshrl.u32 %v570, 7
      %v572 = vsub.s32 %v569, %v571
      %v573 = vrot.slane %v557, %v572
      %v575 = vunpack.c.l.s4 1966171168
      %v576 = vunpack.c.0.s8 %v575
      %v577 = vlaneseq
      %v578 = vshrl.u32 %v577, 7
      %v579 = vsub.s32 %v576, %v578
      %v580 = vrot.slane %v558, %v579
      %v582 = vunpack.c.l.s4 1966171168
      %v583 = vunpack.c.0.s8 %v582
      %v584 = vlaneseq
      %v585 = vshrl.u32 %v584, 7
      %v586 = vsub.s32 %v583, %v585
      %v587 = vrot.slane %v559, %v586
      %v588 = vcombine.high %v566, %v566
      %v589 = vcombine.high %v573, %v573
      %v590 = vcombine.high %v580, %v580
      %v591 = vcombine.high %v587, %v587
      %v592 = vcombine.high %v240, %v240
      %v594 = vunpack.c.l.s4 1966171168
      %v595 = vunpack.c.0.s8 %v594
      %v596 = vlaneseq
      %v597 = vshrl.u32 %v596, 7
      %v598 = vsub.s32 %v595, %v597
      %v599 = vrot.slane %v240, %v598
      %v601 = vunpack.c.l.s4 1966171168
      %v602 = vunpack.c.0.s8 %v601
      %v603 = vlaneseq
      %v604 = vshrl.u32 %v603, 7
      %v605 = vsub.s32 %v602, %v604
      %v606 = vrot.slane %v592, %v605
      %v607 = vcombine.high %v599, %v599
      %v608 = vcombine.high %v606, %v606
      %v610 = vunpack.c.l.s4 1966171168
      %v611 = vunpack.c.0.s8 %v610
      %v612 = vlaneseq
      %v613 = vshrl.u32 %v612, 7
      %v614 = vsub.s32 %v611, %v613
      %v615 = vrot.slane %v599, %v614
      %v617 = vunpack.c.l.s4 1966171168
      %v618 = vunpack.c.0.s8 %v617
      %v619 = vlaneseq
      %v620 = vshrl.u32 %v619, 7
      %v621 = vsub.s32 %v618, %v620
      %v622 = vrot.slane %v606, %v621
      %v624 = vunpack.c.l.s4 1966171168
      %v625 = vunpack.c.0.s8 %v624
      %v626 = vlaneseq
      %v627 = vshrl.u32 %v626, 7
      %v628 = vsub.s32 %v625, %v627
      %v629 = vrot.slane %v607, %v628
      %v631 = vunpack.c.l.s4 1966171168
      %v632 = vunpack.c.0.s8 %v631
      %v633 = vlaneseq
      %v634 = vshrl.u32 %v633, 7
      %v635 = vsub.s32 %v632, %v634
      %v636 = vrot.slane %v608, %v635
      %v637 = vcombine.high %v615, %v615
      %v638 = vcombine.high %v622, %v622
      %v639 = vcombine.high %v629, %v629
      %v640 = vcombine.high %v636, %v636
      %v641 = vlaneseq
      %v642 = vshrl.u32 %v641, 7
      %v643 = vsub.s32 0, %v642
      %v644 = vrot.slane %v272, %v643
      %v645 = vlaneseq
      %v646 = vshrl.u32 %v645, 7
      %v647 = vsub.s32 0, %v646
      %v648 = vrot.slane %v286, %v647
      %v649 = vlaneseq
      %v650 = vshrl.u32 %v649, 7
      %v651 = vsub.s32 0, %v650
      %v652 = vrot.slane %v294, %v651
      %v653 = vlaneseq
      %v654 = vshrl.u32 %v653, 7
      %v655 = vsub.s32 0, %v654
      %v656 = vrot.slane %v296, %v655
      %v657 = vlaneseq
      %v658 = vshrl.u32 %v657, 7
      %v659 = vsub.s32 0, %v658
      %v660 = vrot.slane %v279, %v659
      %v661 = vlaneseq
      %v662 = vshrl.u32 %v661, 7
      %v663 = vsub.s32 0, %v662
      %v664 = vrot.slane %v293, %v663
      %v665 = vlaneseq
      %v666 = vshrl.u32 %v665, 7
      %v667 = vsub.s32 0, %v666
      %v668 = vrot.slane %v295, %v667
      %v669 = vlaneseq
      %v670 = vshrl.u32 %v669, 7
      %v671 = vsub.s32 0, %v670
      %v672 = vrot.slane %v297, %v671
      %v673 = vlaneseq
      %v674 = vshrl.u32 %v673, 7
      %v675 = vsub.s32 0, %v674
      %v676 = vrot.slane %v321, %v675
      %v677 = vlaneseq
      %v678 = vshrl.u32 %v677, 7
      %v679 = vsub.s32 0, %v678
      %v680 = vrot.slane %v335, %v679
      %v681 = vlaneseq
      %v682 = vshrl.u32 %v681, 7
      %v683 = vsub.s32 0, %v682
      %v684 = vrot.slane %v343, %v683
      %v685 = vlaneseq
      %v686 = vshrl.u32 %v685, 7
      %v687 = vsub.s32 0, %v686
      %v688 = vrot.slane %v345, %v687
      %v689 = vlaneseq
      %v690 = vshrl.u32 %v689, 7
      %v691 = vsub.s32 0, %v690
      %v692 = vrot.slane %v328, %v691
      %v693 = vlaneseq
      %v694 = vshrl.u32 %v693, 7
      %v695 = vsub.s32 0, %v694
      %v696 = vrot.slane %v342, %v695
      %v697 = vlaneseq
      %v698 = vshrl.u32 %v697, 7
      %v699 = vsub.s32 0, %v698
      %v700 = vrot.slane %v344, %v699
      %v701 = vlaneseq
      %v702 = vshrl.u32 %v701, 7
      %v703 = vsub.s32 0, %v702
      %v704 = vrot.slane %v346, %v703
      %v705 = vlaneseq
      %v706 = vshrl.u32 %v705, 7
      %v707 = vsub.s32 0, %v706
      %v708 = vrot.slane %v370, %v707
      %v709 = vlaneseq
      %v710 = vshrl.u32 %v709, 7
      %v711 = vsub.s32 0, %v710
      %v712 = vrot.slane %v384, %v711
      %v713 = vlaneseq
      %v714 = vshrl.u32 %v713, 7
      %v715 = vsub.s32 0, %v714
      %v716 = vrot.slane %v392, %v715
      %v717 = vlaneseq
      %v718 = vshrl.u32 %v717, 7
      %v719 = vsub.s32 0, %v718
      %v720 = vrot.slane %v394, %v719
      %v721 = vlaneseq
      %v722 = vshrl.u32 %v721, 7
      %v723 = vsub.s32 0, %v722
      %v724 = vrot.slane %v377, %v723
      %v725 = vlaneseq
      %v726 = vshrl.u32 %v725, 7
      %v727 = vsub.s32 0, %v726
      %v728 = vrot.slane %v391, %v727
      %v729 = vlaneseq
      %v730 = vshrl.u32 %v729, 7
      %v731 = vsub.s32 0, %v730
      %v732 = vrot.slane %v393, %v731
      %v733 = vlaneseq
      %v734 = vshrl.u32 %v733, 7
      %v735 = vsub.s32 0, %v734
      %v736 = vrot.slane %v395, %v735
      %v737 = vlaneseq
      %v738 = vshrl.u32 %v737, 7
      %v739 = vsub.s32 0, %v738
      %v740 = vrot.slane %v419, %v739
      %v741 = vlaneseq
      %v742 = vshrl.u32 %v741, 7
      %v743 = vsub.s32 0, %v742
      %v744 = vrot.slane %v433, %v743
      %v745 = vlaneseq
      %v746 = vshrl.u32 %v745, 7
      %v747 = vsub.s32 0, %v746
      %v748 = vrot.slane %v441, %v747
      %v749 = vlaneseq
      %v750 = vshrl.u32 %v749, 7
      %v751 = vsub.s32 0, %v750
      %v752 = vrot.slane %v443, %v751
      %v753 = vlaneseq
      %v754 = vshrl.u32 %v753, 7
      %v755 = vsub.s32 0, %v754
      %v756 = vrot.slane %v426, %v755
      %v757 = vlaneseq
      %v758 = vshrl.u32 %v757, 7
      %v759 = vsub.s32 0, %v758
      %v760 = vrot.slane %v440, %v759
      %v761 = vlaneseq
      %v762 = vshrl.u32 %v761, 7
      %v763 = vsub.s32 0, %v762
      %v764 = vrot.slane %v442, %v763
      %v765 = vlaneseq
      %v766 = vshrl.u32 %v765, 7
      %v767 = vsub.s32 0, %v766
      %v768 = vrot.slane %v444, %v767
      %v769 = vlaneseq
      %v770 = vshrl.u32 %v769, 7
      %v771 = vsub.s32 0, %v770
      %v772 = vrot.slane %v468, %v771
      %v773 = vlaneseq
      %v774 = vshrl.u32 %v773, 7
      %v775 = vsub.s32 0, %v774
      %v776 = vrot.slane %v482, %v775
      %v777 = vlaneseq
      %v778 = vshrl.u32 %v777, 7
      %v779 = vsub.s32 0, %v778
      %v780 = vrot.slane %v490, %v779
      %v781 = vlaneseq
      %v782 = vshrl.u32 %v781, 7
      %v783 = vsub.s32 0, %v782
      %v784 = vrot.slane %v492, %v783
      %v785 = vlaneseq
      %v786 = vshrl.u32 %v785, 7
      %v787 = vsub.s32 0, %v786
      %v788 = vrot.slane %v475, %v787
      %v789 = vlaneseq
      %v790 = vshrl.u32 %v789, 7
      %v791 = vsub.s32 0, %v790
      %v792 = vrot.slane %v489, %v791
      %v793 = vlaneseq
      %v794 = vshrl.u32 %v793, 7
      %v795 = vsub.s32 0, %v794
      %v796 = vrot.slane %v491, %v795
      %v797 = vlaneseq
      %v798 = vshrl.u32 %v797, 7
      %v799 = vsub.s32 0, %v798
      %v800 = vrot.slane %v493, %v799
      %v801 = vlaneseq
      %v802 = vshrl.u32 %v801, 7
      %v803 = vsub.s32 0, %v802
      %v804 = vrot.slane %v517, %v803
      %v805 = vlaneseq
      %v806 = vshrl.u32 %v805, 7
      %v807 = vsub.s32 0, %v806
      %v808 = vrot.slane %v531, %v807
      %v809 = vlaneseq
      %v810 = vshrl.u32 %v809, 7
      %v811 = vsub.s32 0, %v810
      %v812 = vrot.slane %v539, %v811
      %v813 = vlaneseq
      %v814 = vshrl.u32 %v813, 7
      %v815 = vsub.s32 0, %v814
      %v816 = vrot.slane %v541, %v815
      %v817 = vlaneseq
      %v818 = vshrl.u32 %v817, 7
      %v819 = vsub.s32 0, %v818
      %v820 = vrot.slane %v524, %v819
      %v821 = vlaneseq
      %v822 = vshrl.u32 %v821, 7
      %v823 = vsub.s32 0, %v822
      %v824 = vrot.slane %v538, %v823
      %v825 = vlaneseq
      %v826 = vshrl.u32 %v825, 7
      %v827 = vsub.s32 0, %v826
      %v828 = vrot.slane %v540, %v827
      %v829 = vlaneseq
      %v830 = vshrl.u32 %v829, 7
      %v831 = vsub.s32 0, %v830
      %v832 = vrot.slane %v542, %v831
      %v833 = vlaneseq
      %v834 = vshrl.u32 %v833, 7
      %v835 = vsub.s32 0, %v834
      %v836 = vrot.slane %v566, %v835
      %v837 = vlaneseq
      %v838 = vshrl.u32 %v837, 7
      %v839 = vsub.s32 0, %v838
      %v840 = vrot.slane %v580, %v839
      %v841 = vlaneseq
      %v842 = vshrl.u32 %v841, 7
      %v843 = vsub.s32 0, %v842
      %v844 = vrot.slane %v588, %v843
      %v845 = vlaneseq
      %v846 = vshrl.u32 %v845, 7
      %v847 = vsub.s32 0, %v846
      %v848 = vrot.slane %v590, %v847
      %v849 = vlaneseq
      %v850 = vshrl.u32 %v849, 7
      %v851 = vsub.s32 0, %v850
      %v852 = vrot.slane %v573, %v851
      %v853 = vlaneseq
      %v854 = vshrl.u32 %v853, 7
      %v855 = vsub.s32 0, %v854
      %v856 = vrot.slane %v587, %v855
      %v857 = vlaneseq
      %v858 = vshrl.u32 %v857, 7
      %v859 = vsub.s32 0, %v858
      %v860 = vrot.slane %v589, %v859
      %v861 = vlaneseq
      %v862 = vshrl.u32 %v861, 7
      %v863 = vsub.s32 0, %v862
      %v864 = vrot.slane %v591, %v863
      %v865 = vlaneseq
      %v866 = vshrl.u32 %v865, 7
      %v867 = vsub.s32 0, %v866
      %v868 = vrot.slane %v615, %v867
      %v869 = vlaneseq
      %v870 = vshrl.u32 %v869, 7
      %v871 = vsub.s32 0, %v870
      %v872 = vrot.slane %v629, %v871
      %v873 = vlaneseq
      %v874 = vshrl.u32 %v873, 7
      %v875 = vsub.s32 0, %v874
      %v876 = vrot.slane %v637, %v875
      %v877 = vlaneseq
      %v878 = vshrl.u32 %v877, 7
      %v879 = vsub.s32 0, %v878
      %v880 = vrot.slane %v639, %v879
      %v881 = vlaneseq
      %v882 = vshrl.u32 %v881, 7
      %v883 = vsub.s32 0, %v882
      %v884 = vrot.slane %v622, %v883
      %v885 = vlaneseq
      %v886 = vshrl.u32 %v885, 7
      %v887 = vsub.s32 0, %v886
      %v888 = vrot.slane %v636, %v887
      %v889 = vlaneseq
      %v890 = vshrl.u32 %v889, 7
      %v891 = vsub.s32 0, %v890
      %v892 = vrot.slane %v638, %v891
      %v893 = vlaneseq
      %v894 = vshrl.u32 %v893, 7
      %v895 = vsub.s32 0, %v894
      %v896 = vrot.slane %v640, %v895
      %v961 = vadd.f32 %v169, %v644
      %v962 = vadd.f32 %v170, %v648
      %v963 = vadd.f32 %v171, %v652
      %v964 = vadd.f32 %v172, %v656
      %v965 = vadd.f32 %v173, %v660
      %v966 = vadd.f32 %v174, %v664
      %v967 = vadd.f32 %v175, %v668
      %v968 = vadd.f32 %v176, %v672
      %v969 = vadd.f32 %v177, %v676
      %v970 = vadd.f32 %v178, %v680
      %v971 = vadd.f32 %v179, %v684
      %v972 = vadd.f32 %v180, %v688
      %v973 = vadd.f32 %v181, %v692
      %v974 = vadd.f32 %v182, %v696
      %v975 = vadd.f32 %v183, %v700
      %v976 = vadd.f32 %v184, %v704
      %v977 = vadd.f32 %v185, %v708
      %v978 = vadd.f32 %v186, %v712
      %v979 = vadd.f32 %v187, %v716
      %v980 = vadd.f32 %v188, %v720
      %v981 = vadd.f32 %v189, %v724
      %v982 = vadd.f32 %v190, %v728
      %v983 = vadd.f32 %v191, %v732
      %v984 = vadd.f32 %v192, %v736
      %v985 = vadd.f32 %v193, %v740
      %v986 = vadd.f32 %v194, %v744
      %v987 = vadd.f32 %v195, %v748
      %v988 = vadd.f32 %v196, %v752
      %v989 = vadd.f32 %v197, %v756
      %v990 = vadd.f32 %v198, %v760
      %v991 = vadd.f32 %v199, %v764
      %v992 = vadd.f32 %v200, %v768
      %v993 = vadd.f32 %v201, %v772
      %v994 = vadd.f32 %v202, %v776
      %v995 = vadd.f32 %v203, %v780
      %v996 = vadd.f32 %v204, %v784
      %v997 = vadd.f32 %v205, %v788
      %v998 = vadd.f32 %v206, %v792
      %v999 = vadd.f32 %v207, %v796
      %v1000 = vadd.f32 %v208, %v800
      %v1001 = vadd.f32 %v209, %v804
      %v1002 = vadd.f32 %v210, %v808
      %v1003 = vadd.f32 %v211, %v812
      %v1004 = vadd.f32 %v212, %v816
      %v1005 = vadd.f32 %v213, %v820
      %v1006 = vadd.f32 %v214, %v824
      %v1007 = vadd.f32 %v215, %v828
      %v1008 = vadd.f32 %v216, %v832
      %v1009 = vadd.f32 %v217, %v836
      %v1010 = vadd.f32 %v218, %v840
      %v1011 = vadd.f32 %v219, %v844
      %v1012 = vadd.f32 %v220, %v848
      %v1013 = vadd.f32 %v221, %v852
      %v1014 = vadd.f32 %v222, %v856
      %v1015 = vadd.f32 %v223, %v860
      %v1016 = vadd.f32 %v224, %v864
      %v1017 = vadd.f32 %v225, %v868
      %v1018 = vadd.f32 %v226, %v872
      %v1019 = vadd.f32 %v227, %v876
      %v1020 = vadd.f32 %v228, %v880
      %v1021 = vadd.f32 %v229, %v884
      %v1022 = vadd.f32 %v230, %v888
      %v1023 = vadd.f32 %v231, %v892
      %v1024 = vadd.f32 %v232, %v896
      %vm1025 = vcmask 254976
      %1026 = vst.msk [vmem:[%s167] sm:$0x3] %vm1025, %v961
      %1027 = vst.msk [vmem:[%s167 + $0x2] sm:$0x3] %vm1025, %v962
      %1028 = vst.msk [vmem:[%s167 + $0x4] sm:$0x3] %vm1025, %v963
      %1029 = vst.msk [vmem:[%s167 + $0x6] sm:$0x3] %vm1025, %v964
      %1030 = vst.msk [vmem:[%s167 + $0x8] sm:$0x3] %vm1025, %v965
      %1031 = vst.msk [vmem:[%s167 + $0xa] sm:$0x3] %vm1025, %v966
      %1032 = vst.msk [vmem:[%s167 + $0xc] sm:$0x3] %vm1025, %v967
      %1033 = vst.msk [vmem:[%s167 + $0xe] sm:$0x3] %vm1025, %v968
      %1034 = vst.msk [vmem:[%s167 + $0x10] sm:$0x3] %vm1025, %v969
      %1035 = vst.msk [vmem:[%s167 + $0x12] sm:$0x3] %vm1025, %v970
      %1036 = vst.msk [vmem:[%s167 + $0x14] sm:$0x3] %vm1025, %v971
      %1037 = vst.msk [vmem:[%s167 + $0x16] sm:$0x3] %vm1025, %v972
      %1038 = vst.msk [vmem:[%s167 + $0x18] sm:$0x3] %vm1025, %v973
      %1039 = vst.msk [vmem:[%s167 + $0x1a] sm:$0x3] %vm1025, %v974
      %1040 = vst.msk [vmem:[%s167 + $0x1c] sm:$0x3] %vm1025, %v975
      %1041 = vst.msk [vmem:[%s167 + $0x1e] sm:$0x3] %vm1025, %v976
      %1042 = vst.msk [vmem:[%s167 + $0x20] sm:$0x3] %vm1025, %v977
      %1043 = vst.msk [vmem:[%s167 + $0x22] sm:$0x3] %vm1025, %v978
      %1044 = vst.msk [vmem:[%s167 + $0x24] sm:$0x3] %vm1025, %v979
      %1045 = vst.msk [vmem:[%s167 + $0x26] sm:$0x3] %vm1025, %v980
      %1046 = vst.msk [vmem:[%s167 + $0x28] sm:$0x3] %vm1025, %v981
      %1047 = vst.msk [vmem:[%s167 + $0x2a] sm:$0x3] %vm1025, %v982
      %1048 = vst.msk [vmem:[%s167 + $0x2c] sm:$0x3] %vm1025, %v983
      %1049 = vst.msk [vmem:[%s167 + $0x2e] sm:$0x3] %vm1025, %v984
      %1050 = vst.msk [vmem:[%s167 + $0x30] sm:$0x3] %vm1025, %v985
      %1051 = vst.msk [vmem:[%s167 + $0x32] sm:$0x3] %vm1025, %v986
      %1052 = vst.msk [vmem:[%s167 + $0x34] sm:$0x3] %vm1025, %v987
      %1053 = vst.msk [vmem:[%s167 + $0x36] sm:$0x3] %vm1025, %v988
      %1054 = vst.msk [vmem:[%s167 + $0x38] sm:$0x3] %vm1025, %v989
      %1055 = vst.msk [vmem:[%s167 + $0x3a] sm:$0x3] %vm1025, %v990
      %1056 = vst.msk [vmem:[%s167 + $0x3c] sm:$0x3] %vm1025, %v991
      %1057 = vst.msk [vmem:[%s167 + $0x3e] sm:$0x3] %vm1025, %v992
      %1058 = vst.msk [vmem:[%s167 + $0x40] sm:$0x3] %vm1025, %v993
      %1059 = vst.msk [vmem:[%s167 + $0x42] sm:$0x3] %vm1025, %v994
      %1060 = vst.msk [vmem:[%s167 + $0x44] sm:$0x3] %vm1025, %v995
      %1061 = vst.msk [vmem:[%s167 + $0x46] sm:$0x3] %vm1025, %v996
      %1062 = vst.msk [vmem:[%s167 + $0x48] sm:$0x3] %vm1025, %v997
      %1063 = vst.msk [vmem:[%s167 + $0x4a] sm:$0x3] %vm1025, %v998
      %1064 = vst.msk [vmem:[%s167 + $0x4c] sm:$0x3] %vm1025, %v999
      %1065 = vst.msk [vmem:[%s167 + $0x4e] sm:$0x3] %vm1025, %v1000
      %1066 = vst.msk [vmem:[%s167 + $0x50] sm:$0x3] %vm1025, %v1001
      %1067 = vst.msk [vmem:[%s167 + $0x52] sm:$0x3] %vm1025, %v1002
      %1068 = vst.msk [vmem:[%s167 + $0x54] sm:$0x3] %vm1025, %v1003
      %1069 = vst.msk [vmem:[%s167 + $0x56] sm:$0x3] %vm1025, %v1004
      %1070 = vst.msk [vmem:[%s167 + $0x58] sm:$0x3] %vm1025, %v1005
      %1071 = vst.msk [vmem:[%s167 + $0x5a] sm:$0x3] %vm1025, %v1006
      %1072 = vst.msk [vmem:[%s167 + $0x5c] sm:$0x3] %vm1025, %v1007
      %1073 = vst.msk [vmem:[%s167 + $0x5e] sm:$0x3] %vm1025, %v1008
      %1074 = vst.msk [vmem:[%s167 + $0x60] sm:$0x3] %vm1025, %v1009
      %1075 = vst.msk [vmem:[%s167 + $0x62] sm:$0x3] %vm1025, %v1010
      %1076 = vst.msk [vmem:[%s167 + $0x64] sm:$0x3] %vm1025, %v1011
      %1077 = vst.msk [vmem:[%s167 + $0x66] sm:$0x3] %vm1025, %v1012
      %1078 = vst.msk [vmem:[%s167 + $0x68] sm:$0x3] %vm1025, %v1013
      %1079 = vst.msk [vmem:[%s167 + $0x6a] sm:$0x3] %vm1025, %v1014
      %1080 = vst.msk [vmem:[%s167 + $0x6c] sm:$0x3] %vm1025, %v1015
      %1081 = vst.msk [vmem:[%s167 + $0x6e] sm:$0x3] %vm1025, %v1016
      %1082 = vst.msk [vmem:[%s167 + $0x70] sm:$0x3] %vm1025, %v1017
      %1083 = vst.msk [vmem:[%s167 + $0x72] sm:$0x3] %vm1025, %v1018
      %1084 = vst.msk [vmem:[%s167 + $0x74] sm:$0x3] %vm1025, %v1019
      %1085 = vst.msk [vmem:[%s167 + $0x76] sm:$0x3] %vm1025, %v1020
      %1086 = vst.msk [vmem:[%s167 + $0x78] sm:$0x3] %vm1025, %v1021
      %1087 = vst.msk [vmem:[%s167 + $0x7a] sm:$0x3] %vm1025, %v1022
      %1088 = vst.msk [vmem:[%s167 + $0x7c] sm:$0x3] %vm1025, %v1023
      %1089 = vst.msk [vmem:[%s167 + $0x7e] sm:$0x3] %vm1025, %v1024
      %s1090 = smul.u32 64, %s13
      %p1091 = scmp.lt.s32.totalorder %s1090, 127
      %s1092 = scalar_select %p1091, %s1090, 127
      %s1093 = smul.addr %s1092, 2
      %s1094 = scalar_lea.vmem %s2, %s1093
      // Predicated region
      $region29: #{positional_encoding_forward.1} parent=27 // pred_check
        %p1095 = pneg %p83
      $region30: #{positional_encoding_forward.1} parent=27 // pred_check_branch
        %1097 = sbr.rel (%p1095) target = $region32
      $region31: #{positional_encoding_forward.1} parent=27 // pred_region
        %s1098 = smul.u32 64, %s13
      $region32: #{positional_encoding_forward.1} parent=27 // pred_fallthru
        _
    $region28: #{positional_encoding_forward.1} parent=5 // pred_fallthru
      _
    %p1099 = scmp.le.s32.totalorder 2, %s8
    // Predicated region
    $region33: #{positional_encoding_forward.1} parent=5 // pred_check
      %p1100 = pneg %p1099
    $region34: #{positional_encoding_forward.1} parent=5 // pred_check_branch
      %1102 = sbr.rel (%p1100) target = $region36
    $region35: #{positional_encoding_forward.1} parent=5 // pred_region
      %s1103 = ssub.s32 %s8, 2
      // Predicated region
      $region37: #{positional_encoding_forward.1} parent=35 // pred_check
        %p1104 = pneg %p89
      $region38: #{positional_encoding_forward.1} parent=35 // pred_check_branch
        %1106 = sbr.rel (%p1104) target = $region40
      $region39: #{positional_encoding_forward.1} parent=35 // pred_region
        %s1107 = smul.u32 64, %s14
        %p1108 = scmp.lt.s32.totalorder %s1107, 127
        %s1109 = scalar_select %p1108, %s1107, 127
        %s1110 = smul.addr %s1109, 2
        %s1111 = scalar_lea.vmem %s2, %s1110
      $region40: #{positional_encoding_forward.1} parent=35 // pred_fallthru
        _
    $region36: #{positional_encoding_forward.1} parent=5 // pred_fallthru
      _
  $region6: #{positional_encoding_forward.1} parent=0 // loop_footer
    %s12 = sadd.s32 1, %s8
  $region7: #{positional_encoding_forward.1} parent=0 // loop_footer_branch
    %7 = sbr.rel target = $region3
  $region8: #{positional_encoding_forward.1} parent=0 // loop_exit
    _

</llo_original>
